<compile_context>
chip_gen: v7x
topology: tpu7x:2x2x1
jax: 0.10.0
libtpu: 0.0.40
codegen_flags: <defaults>
</compile_context>

<pallas_src>
import functools

import jax
import jax.numpy as jnp
from jax.experimental import pallas as pl
from jax.experimental.pallas import tpu as pltpu

LANE = 128  # lane-dense padded output width (multiple of 128)


def _round_up(n, m):
    return ((n + m - 1) // m) * m


def domain_classifier_kernel(x_ref, w1_ref, b1_ref, w2_ref, b2_ref, o_ref):
    # fc1 with BN folded in: (TB, D)bf16 @ (D, H)bf16, f32 accumulation on the MXU.
    h = jnp.dot(x_ref[...], w1_ref[...], preferred_element_type=jnp.float32)
    # bias/shift + ReLU in f32 on the VPU.
    h = jnp.maximum(h + b1_ref[...], 0.0)
    # Dropout: identity in eval mode.
    # TODO(synk): training-mode dropout would need pltpu.prng_seed/prng_random_bits.
    # fc2, zero-padded to a lane-dense (H, 128) slab -> unmasked full-width stores.
    out = jnp.dot(h.astype(w2_ref.dtype), w2_ref[...],
                  preferred_element_type=jnp.float32)
    o_ref[...] = (out + b2_ref[...]).astype(o_ref.dtype)


def fold_params(params, eps=1e-5):
    """One-time parameter prep (run once, outside the per-call hot path):
    fold BN into fc1, pre-transpose weights, cast matmul operands to bf16,
    and zero-pad fc2 to a lane-dense (H, 128) / (1, 128) layout."""
    H = params["fc1_w"].shape[0]
    inv_std = 1.0 / jnp.sqrt(params["bn1_running_var"] + eps)
    scale = params["bn1_gamma"] * inv_std                         # (H,)
    shift = params["bn1_beta"] - params["bn1_running_mean"] * scale
    w1f = (params["fc1_w"].T * scale[None, :]).astype(jnp.bfloat16)         # (D, H)
    b1f = (params["fc1_b"] * scale + shift).astype(jnp.float32).reshape(1, H)
    w2p = jnp.zeros((H, LANE), jnp.float32).at[:, :2].set(params["fc2_w"].T)
    b2p = jnp.zeros((1, LANE), jnp.float32).at[:, :2].set(params["fc2_b"])
    return {"w1": w1f, "b1": b1f, "w2": w2p.astype(jnp.bfloat16), "b2": b2p}


@functools.partial(jax.jit, static_argnames=("tb",))
def domain_classifier_forward(x, folded, *, tb=512):
    """x: (B, D) float32; folded: output of fold_params."""
    B, D = x.shape
    H = folded["w1"].shape[1]

    # Batch tile: multiple of 8 sublanes, capped at tb; pad B up to a multiple of TB.
    TB = _round_up(B, 8) if B <= tb else tb
    Bp = _round_up(B, TB)
    xb = x.astype(jnp.bfloat16)
    if Bp != B:
        xb = jnp.pad(xb, ((0, Bp - B), (0, 0)))

    grid = (Bp // TB,)

    # Actual VMEM working set: double-buffered x/out tiles + resident weights/biases.
    vmem_need = (2 * TB * D * 2 + 2 * TB * LANE * 4
                 + D * H * 2 + H * LANE * 2 + (H + LANE) * 4)
    vmem_limit = int(min(max(2 * vmem_need, 8 << 20), 48 << 20))  # v7x-safe (<64 MiB)

    cost = pl.CostEstimate(
        flops=2 * Bp * D * H + 2 * Bp * H * LANE,
        transcendentals=0,
        bytes_accessed=Bp * D * 2 + D * H * 2 + H * LANE * 2
                       + (H + LANE) * 4 + Bp * LANE * 4)

    resident = lambda shape: pl.BlockSpec(shape, lambda i: (0, 0))

    # NOTE: for large D/H (beyond these shapes) a K-axis grid with a f32 VMEM
    # accumulator + pl.when init/finalize would be added; D=256/H=512-class
    # weights easily fit VMEM so a single K pass is optimal here.
    out = pl.pallas_call(
        domain_classifier_kernel,
        out_shape=jax.ShapeDtypeStruct((Bp, LANE), jnp.float32),
        grid=grid,
        in_specs=[
            pl.BlockSpec((TB, D), lambda i: (i, 0)),   # x: streamed batch tiles
            resident((D, H)),                          # w1' (BN folded), VMEM-resident
            resident((1, H)),                          # b1'
            resident((H, LANE)),                       # w2 (lane-dense padded)
            resident((1, LANE)),                       # b2 (lane-dense padded)
        ],
        out_specs=pl.BlockSpec((TB, LANE), lambda i: (i, 0)),
        compiler_params=pltpu.CompilerParams(
            dimension_semantics=("parallel",),         # megacore sharding on v7x
            vmem_limit_bytes=vmem_limit),
        cost_estimate=cost,
    )(xb, folded["w1"], folded["b1"], folded["w2"], folded["b2"])

    return out[:B, :2]


def init_params(key, input_dim, hidden_dim):
    k1, k2, k3, k4 = jax.random.split(key, 4)
    # PyTorch Linear default init: U(-1/sqrt(fan_in), 1/sqrt(fan_in))
    bound1 = 1.0 / jnp.sqrt(input_dim)
    bound2 = 1.0 / jnp.sqrt(hidden_dim)
    return {
        "fc1_w": jax.random.uniform(k1, (hidden_dim, input_dim), jnp.float32,
                                    -bound1, bound1),
        "fc1_b": jax.random.uniform(k2, (hidden_dim,), jnp.float32, -bound1, bound1),
        "bn1_gamma": jnp.ones((hidden_dim,), jnp.float32),
        "bn1_beta": jnp.zeros((hidden_dim,), jnp.float32),
        "bn1_running_mean": jnp.zeros((hidden_dim,), jnp.float32),
        "bn1_running_var": jnp.ones((hidden_dim,), jnp.float32),
        "fc2_w": jax.random.uniform(k3, (2, hidden_dim), jnp.float32,
                                    -bound2, bound2),
        "fc2_b": jax.random.uniform(k4, (2,), jnp.float32, -bound2, bound2),
    }


def reference_forward(x, params):
    """Pure-JAX f32 reference matching PyTorch eval-mode forward."""
    eps = 1e-5
    h = x @ params["fc1_w"].T + params["fc1_b"]
    h = (h - params["bn1_running_mean"]) / jnp.sqrt(params["bn1_running_var"] + eps)
    h = h * params["bn1_gamma"] + params["bn1_beta"]
    h = jnp.maximum(h, 0.0)
    return h @ params["fc2_w"].T + params["fc2_b"]


if __name__ == "__main__":
    # Small shapes consistent with the module (Linear on (batch, features)).
    batch, input_dim, hidden_dim = 256, 256, 128

    key = jax.random.PRNGKey(0)
    kx, kp = jax.random.split(key)
    x = jax.random.normal(kx, (batch, input_dim), jnp.float32)
    params = init_params(kp, input_dim, hidden_dim)

    folded = jax.block_until_ready(fold_params(params))   # one-time prep

    out = domain_classifier_forward(x, folded, tb=128)    # grid=(2,), exercises tiling
    out = jax.block_until_ready(out)

    ref = reference_forward(x, params)
    assert out.shape == (batch, 2)
    max_err = float(jnp.max(jnp.abs(out - ref)))
    # bf16 matmul operands with f32 accumulation -> loose-but-tight-enough tolerance.
    assert jnp.allclose(out, ref, atol=5e-2, rtol=5e-2), f"mismatch vs reference: {max_err}"

    print("KERNEL_OK")
</pallas_src>

<mosaic_0001>
module attributes {stable_mosaic.version = 11 : i64} {
  func.func @domain_classifier_kernel(%arg0: i32, %arg1: memref<128x256xbf16, #tpu.memory_space<vmem>>, %arg2: memref<256x128xbf16, #tpu.memory_space<vmem>>, %arg3: memref<1x128xf32, #tpu.memory_space<vmem>>, %arg4: memref<128x128xbf16, #tpu.memory_space<vmem>>, %arg5: memref<1x128xf32, #tpu.memory_space<vmem>>, %arg6: memref<128x128xf32, #tpu.memory_space<vmem>>) attributes {dimension_semantics = [#tpu.dimension_semantics<parallel>], iteration_bounds = array<i64: 2>, scalar_prefetch = 0 : i64, scratch_operands = 0 : i64, tpu.core_type = #tpu.core_type<tc>, window_params = [{transform_indices = @transform_0, window_bounds = array<i64: 128, 256>}, {pipeline_mode = #tpu.pipeline_mode<synchronous>, transform_indices = @transform_1, window_bounds = array<i64: 256, 128>}, {pipeline_mode = #tpu.pipeline_mode<synchronous>, transform_indices = @transform_2, window_bounds = array<i64: 1, 128>}, {pipeline_mode = #tpu.pipeline_mode<synchronous>, transform_indices = @transform_3, window_bounds = array<i64: 128, 128>}, {pipeline_mode = #tpu.pipeline_mode<synchronous>, transform_indices = @transform_4, window_bounds = array<i64: 1, 128>}, {transform_indices = @transform_5, window_bounds = array<i64: 128, 128>}]} {
    %c0 = arith.constant 0 : index
    %c0_0 = arith.constant 0 : index
    %0 = vector.load %arg1[%c0, %c0_0] : memref<128x256xbf16, #tpu.memory_space<vmem>>, vector<128x256xbf16>
    %c0_1 = arith.constant 0 : index
    %c0_2 = arith.constant 0 : index
    %1 = vector.load %arg2[%c0_1, %c0_2] : memref<256x128xbf16, #tpu.memory_space<vmem>>, vector<256x128xbf16>
    %cst = arith.constant dense<0.000000e+00> : vector<128x128xf32>
    %2 = tpu.matmul %0, %1, %cst {dimension_numbers = #tpu.dot_dimension_numbers<[1], [0], [0], [1], [0, 0, 1, 1], [], []>} : vector<128x256xbf16>, vector<256x128xbf16>, vector<128x128xf32> -> vector<128x128xf32>
    %c0_3 = arith.constant 0 : index
    %c0_4 = arith.constant 0 : index
    %3 = vector.load %arg3[%c0_3, %c0_4] : memref<1x128xf32, #tpu.memory_space<vmem>>, vector<1x128xf32>
    %4 = vector.broadcast %3 : vector<1x128xf32> to vector<128x128xf32>
    %5 = arith.addf %2, %4 : vector<128x128xf32>
    %cst_5 = arith.constant 0.000000e+00 : f32
    %6 = vector.broadcast %cst_5 : f32 to vector<128x128xf32>
    %7 = arith.maximumf %5, %6 : vector<128x128xf32>
    %8 = arith.truncf %7 : vector<128x128xf32> to vector<128x128xbf16>
    %c0_6 = arith.constant 0 : index
    %c0_7 = arith.constant 0 : index
    %9 = vector.load %arg4[%c0_6, %c0_7] : memref<128x128xbf16, #tpu.memory_space<vmem>>, vector<128x128xbf16>
    %cst_8 = arith.constant dense<0.000000e+00> : vector<128x128xf32>
    %10 = tpu.matmul %8, %9, %cst_8 {dimension_numbers = #tpu.dot_dimension_numbers<[1], [0], [0], [1], [0, 0, 1, 1], [], []>} : vector<128x128xbf16>, vector<128x128xbf16>, vector<128x128xf32> -> vector<128x128xf32>
    %c0_9 = arith.constant 0 : index
    %c0_10 = arith.constant 0 : index
    %11 = vector.load %arg5[%c0_9, %c0_10] : memref<1x128xf32, #tpu.memory_space<vmem>>, vector<1x128xf32>
    %12 = vector.broadcast %11 : vector<1x128xf32> to vector<128x128xf32>
    %13 = arith.addf %10, %12 : vector<128x128xf32>
    %c0_11 = arith.constant 0 : index
    %c0_12 = arith.constant 0 : index
    %14 = vector.load %arg6[%c0_11, %c0_12] : memref<128x128xf32, #tpu.memory_space<vmem>>, vector<128x128xf32>
    tpu.vector_store %arg6[%c0_11, %c0_12], %13 {strides = array<i32>} : memref<128x128xf32, #tpu.memory_space<vmem>>, vector<128x128xf32>,
    return
  }
  func.func @transform_0(%arg0: i32) -> (i32, i32) {
    %c0_i32 = arith.constant 0 : i32
    %c0_i32_0 = arith.constant 0 : i32
    return %arg0, %c0_i32 : i32, i32
  }
  func.func @transform_1(%arg0: i32) -> (i32, i32) {
    %c0_i32 = arith.constant 0 : i32
    %c0_i32_0 = arith.constant 0 : i32
    %c0_i32_1 = arith.constant 0 : i32
    return %c0_i32, %c0_i32_0 : i32, i32
  }
  func.func @transform_2(%arg0: i32) -> (i32, i32) {
    %c0_i32 = arith.constant 0 : i32
    %c0_i32_0 = arith.constant 0 : i32
    %c0_i32_1 = arith.constant 0 : i32
    return %c0_i32, %c0_i32_0 : i32, i32
  }
  func.func @transform_3(%arg0: i32) -> (i32, i32) {
    %c0_i32 = arith.constant 0 : i32
    %c0_i32_0 = arith.constant 0 : i32
    %c0_i32_1 = arith.constant 0 : i32
    return %c0_i32, %c0_i32_0 : i32, i32
  }
  func.func @transform_4(%arg0: i32) -> (i32, i32) {
    %c0_i32 = arith.constant 0 : i32
    %c0_i32_0 = arith.constant 0 : i32
    %c0_i32_1 = arith.constant 0 : i32
    return %c0_i32, %c0_i32_0 : i32, i32
  }
  func.func @transform_5(%arg0: i32) -> (i32, i32) {
    %c0_i32 = arith.constant 0 : i32
    %c0_i32_0 = arith.constant 0 : i32
    return %arg0, %c0_i32 : i32, i32
  }
}

</mosaic_0001>

<llo_original>
// kernel: domain_classifier_forward.1
$region0: #{domain_classifier_forward.1}
  #allocation0 [shape = 'u32[]', space=smem, size = 0x4, offset = 0x4, fixed_abs, tag = 'smem constant byte address 0x4 - core index']
  #allocation1 [shape = 'u32[144,128]{1,0:T(1,128)}', space=vmem, size = 0x12000, scoped, tag = 'internal scratch']
  %s0 = inlined_call_operand.vmem [shape: bf16[256,256], index: 0, kind: input, shape index: {}]
  %s1 = inlined_call_operand.vmem [shape: bf16[256,128], index: 1, kind: input, shape index: {}]
  %s2 = inlined_call_operand.vmem [shape: f32[1,128], index: 2, kind: input, shape index: {}]
  %s3 = inlined_call_operand.vmem [shape: bf16[128,128], index: 3, kind: input, shape index: {}]
  %s4 = inlined_call_operand.vmem [shape: f32[1,128], index: 4, kind: input, shape index: {}]
  %s5 = inlined_call_operand.vmem [shape: f32[256,128], index: 5, kind: output, shape index: {}]
  %s6 = sld [smem:[#allocation0]]
  $region53: #{domain_classifier_forward.1} parent=0
    _
  %s8 = ssub.s32 1, %s6
  %s9 = scalar_select 0, %s8, %s6
  loop: start=0, step=1, limit=4
  $region2: #{domain_classifier_forward.1} parent=0 // loop_pre_header
    _
  $region3: #{domain_classifier_forward.1} parent=0 // loop_header
    %s11 = sphi 0, %s15
    %p12 = scmp.ge.s32.totalorder %s11, 4
    %s21 = sphi 0, %s23
    %s24 = sphi 0, %s21
    %s25 = sphi 0, %s24
    %s41 = sphi 0, %s25
    %s45 = sphi 0, %s45
    %s47 = sphi 0, %s45
    %s48 = sphi 0, %s47
    %s62 = sphi 0, %s48
    %s66 = sphi 0, %s66
    %s68 = sphi 0, %s66
    %s69 = sphi 0, %s68
    %s83 = sphi 0, %s69
    %s87 = sphi 0, %s87
    %s89 = sphi 0, %s87
    %s90 = sphi 0, %s89
    %s104 = sphi 0, %s90
    %s108 = sphi 0, %s108
    %s110 = sphi 0, %s108
    %s111 = sphi 0, %s110
    %s125 = sphi 0, %s111
    %s131 = sphi 0, %s133
    %s134 = sphi 0, %s131
    %s135 = sphi 0, %s134
    %s151 = sphi 0, %s135
  $region4: #{domain_classifier_forward.1} parent=0 // loop_header_branch
    %14 = sbr.rel (%p12) target = $region8
  $region5: #{domain_classifier_forward.1} parent=0 // loop_body
    %s16 = ssub.s32 %s11, 1
    %s17 = ssub.s32 %s11, 2
    %s18 = sadd.s32 %s11, 1
    %s19 = ssub.s32 %s11, %s18
    %p20 = scmp.eq.s32.totalorder %s19, 0
    %s22 = sadd.s32 %s21, 1
    %s23 = scalar_select %p20, %s21, %s22
    %p26 = pneg %p20
    %p27 = scmp.eq.s32.totalorder %s11, 1
    %p28 = por %p26, %p27
    %p29 = scmp.ne.s32.totalorder %s21, %s24
    %p30 = scmp.eq.s32.totalorder %s11, 0
    %p31 = por %p29, %p30
    %p32 = scmp.ne.s32.totalorder %s21, %s24
    %p33 = scmp.eq.s32.totalorder %s16, 1
    %p34 = por %p32, %p33
    %p35 = scmp.ne.s32.totalorder %s24, %s25
    %p36 = scmp.eq.s32.totalorder %s16, 0
    %p37 = por %p35, %p36
    %p38 = scmp.ne.s32.totalorder %s24, %s25
    %p39 = scmp.eq.s32.totalorder %s17, 1
    %p40 = por %p38, %p39
    %p42 = scmp.ne.s32.totalorder %s25, %s41
    %p43 = scmp.eq.s32.totalorder %s17, 0
    %p44 = por %p42, %p43
    %s46 = sadd.s32 %s45, 1
    %p49 = scmp.eq.s32.totalorder %s11, 1
    %p50 = scmp.ne.s32.totalorder %s45, %s47
    %p51 = scmp.eq.s32.totalorder %s11, 0
    %p52 = por %p50, %p51
    %p53 = scmp.ne.s32.totalorder %s45, %s47
    %p54 = scmp.eq.s32.totalorder %s16, 1
    %p55 = por %p53, %p54
    %p56 = scmp.ne.s32.totalorder %s47, %s48
    %p57 = scmp.eq.s32.totalorder %s16, 0
    %p58 = por %p56, %p57
    %p59 = scmp.ne.s32.totalorder %s47, %s48
    %p60 = scmp.eq.s32.totalorder %s17, 1
    %p61 = por %p59, %p60
    %p63 = scmp.ne.s32.totalorder %s48, %s62
    %p64 = scmp.eq.s32.totalorder %s17, 0
    %p65 = por %p63, %p64
    %s67 = sadd.s32 %s66, 1
    %p70 = scmp.eq.s32.totalorder %s11, 1
    %p71 = scmp.ne.s32.totalorder %s66, %s68
    %p72 = scmp.eq.s32.totalorder %s11, 0
    %p73 = por %p71, %p72
    %p74 = scmp.ne.s32.totalorder %s66, %s68
    %p75 = scmp.eq.s32.totalorder %s16, 1
    %p76 = por %p74, %p75
    %p77 = scmp.ne.s32.totalorder %s68, %s69
    %p78 = scmp.eq.s32.totalorder %s16, 0
    %p79 = por %p77, %p78
    %p80 = scmp.ne.s32.totalorder %s68, %s69
    %p81 = scmp.eq.s32.totalorder %s17, 1
    %p82 = por %p80, %p81
    %p84 = scmp.ne.s32.totalorder %s69, %s83
    %p85 = scmp.eq.s32.totalorder %s17, 0
    %p86 = por %p84, %p85
    %s88 = sadd.s32 %s87, 1
    %p91 = scmp.eq.s32.totalorder %s11, 1
    %p92 = scmp.ne.s32.totalorder %s87, %s89
    %p93 = scmp.eq.s32.totalorder %s11, 0
    %p94 = por %p92, %p93
    %p95 = scmp.ne.s32.totalorder %s87, %s89
    %p96 = scmp.eq.s32.totalorder %s16, 1
    %p97 = por %p95, %p96
    %p98 = scmp.ne.s32.totalorder %s89, %s90
    %p99 = scmp.eq.s32.totalorder %s16, 0
    %p100 = por %p98, %p99
    %p101 = scmp.ne.s32.totalorder %s89, %s90
    %p102 = scmp.eq.s32.totalorder %s17, 1
    %p103 = por %p101, %p102
    %p105 = scmp.ne.s32.totalorder %s90, %s104
    %p106 = scmp.eq.s32.totalorder %s17, 0
    %p107 = por %p105, %p106
    %s109 = sadd.s32 %s108, 1
    %p112 = scmp.eq.s32.totalorder %s11, 1
    %p113 = scmp.ne.s32.totalorder %s108, %s110
    %p114 = scmp.eq.s32.totalorder %s11, 0
    %p115 = por %p113, %p114
    %p116 = scmp.ne.s32.totalorder %s108, %s110
    %p117 = scmp.eq.s32.totalorder %s16, 1
    %p118 = por %p116, %p117
    %p119 = scmp.ne.s32.totalorder %s110, %s111
    %p120 = scmp.eq.s32.totalorder %s16, 0
    %p121 = por %p119, %p120
    %p122 = scmp.ne.s32.totalorder %s110, %s111
    %p123 = scmp.eq.s32.totalorder %s17, 1
    %p124 = por %p122, %p123
    %p126 = scmp.ne.s32.totalorder %s111, %s125
    %p127 = scmp.eq.s32.totalorder %s17, 0
    %p128 = por %p126, %p127
    %s129 = ssub.s32 %s11, %s18
    %p130 = scmp.eq.s32.totalorder %s129, 0
    %s132 = sadd.s32 %s131, 1
    %s133 = scalar_select %p130, %s131, %s132
    %p136 = pneg %p130
    %p137 = scmp.eq.s32.totalorder %s11, 1
    %p138 = por %p136, %p137
    %p139 = scmp.ne.s32.totalorder %s131, %s134
    %p140 = scmp.eq.s32.totalorder %s11, 0
    %p141 = por %p139, %p140
    %p142 = scmp.ne.s32.totalorder %s131, %s134
    %p143 = scmp.eq.s32.totalorder %s16, 1
    %p144 = por %p142, %p143
    %p145 = scmp.ne.s32.totalorder %s134, %s135
    %p146 = scmp.eq.s32.totalorder %s16, 0
    %p147 = por %p145, %p146
    %p148 = scmp.ne.s32.totalorder %s134, %s135
    %p149 = scmp.eq.s32.totalorder %s17, 1
    %p150 = por %p148, %p149
    %p152 = scmp.ne.s32.totalorder %s135, %s151
    %p153 = scmp.eq.s32.totalorder %s17, 0
    %p154 = por %p152, %p153
    %p155 = scmp.le.s32.totalorder 1, %s11
    %p156 = scmp.lt.s32.totalorder %s11, 3
    %p157 = pnand %p155, %p156
    %p158 = pneg %p157
    // Predicated region
    $region9: #{domain_classifier_forward.1} parent=5 // pred_check
      _
    $region10: #{domain_classifier_forward.1} parent=5 // pred_check_branch
      %160 = sbr.rel (%p157) target = $region12
    $region11: #{domain_classifier_forward.1} parent=5 // pred_region
      %s161 = ssub.s32 %s11, 1
      // Predicated region
      $region13: #{domain_classifier_forward.1} parent=11 // pred_check
        %p162 = pneg %p58
      $region14: #{domain_classifier_forward.1} parent=11 // pred_check_branch
        %164 = sbr.rel (%p162) target = $region16
      $region15: #{domain_classifier_forward.1} parent=11 // pred_region
        _
      $region16: #{domain_classifier_forward.1} parent=11 // pred_fallthru
        _
      // Predicated region
      $region17: #{domain_classifier_forward.1} parent=11 // pred_check
        %p165 = pneg %p79
      $region18: #{domain_classifier_forward.1} parent=11 // pred_check_branch
        %167 = sbr.rel (%p165) target = $region20
      $region19: #{domain_classifier_forward.1} parent=11 // pred_region
        _
      $region20: #{domain_classifier_forward.1} parent=11 // pred_fallthru
        _
      // Predicated region
      $region21: #{domain_classifier_forward.1} parent=11 // pred_check
        %p168 = pneg %p100
      $region22: #{domain_classifier_forward.1} parent=11 // pred_check_branch
        %170 = sbr.rel (%p168) target = $region24
      $region23: #{domain_classifier_forward.1} parent=11 // pred_region
        _
      $region24: #{domain_classifier_forward.1} parent=11 // pred_fallthru
        _
      // Predicated region
      $region25: #{domain_classifier_forward.1} parent=11 // pred_check
        %p171 = pneg %p121
      $region26: #{domain_classifier_forward.1} parent=11 // pred_check_branch
        %173 = sbr.rel (%p171) target = $region28
      $region27: #{domain_classifier_forward.1} parent=11 // pred_region
        _
      $region28: #{domain_classifier_forward.1} parent=11 // pred_fallthru
        _
    $region12: #{domain_classifier_forward.1} parent=5 // pred_fallthru
      _
    %p174 = scmp.lt.s32.totalorder %s11, 2
    // Predicated region
    $region29: #{domain_classifier_forward.1} parent=5 // pred_check
      %p175 = pneg %p174
    $region30: #{domain_classifier_forward.1} parent=5 // pred_check_branch
      %177 = sbr.rel (%p175) target = $region32
    $region31: #{domain_classifier_forward.1} parent=5 // pred_region
      // Predicated region
      $region33: #{domain_classifier_forward.1} parent=31 // pred_check
        %p178 = pneg %p31
      $region34: #{domain_classifier_forward.1} parent=31 // pred_check_branch
        %180 = sbr.rel (%p178) target = $region36
      $region35: #{domain_classifier_forward.1} parent=31 // pred_region
        %s181 = smul.u32 16, %s11
        %p182 = scmp.lt.s32.totalorder %s181, 31
        %s183 = scalar_select %p182, %s181, 31
        %s184 = smul.addr %s183, 2
        %s185 = smul.addr %s184, 4
        %s186 = scalar_lea.vmem %s0, %s185
        %s187 = smul.u32 16, %s11
      $region36: #{domain_classifier_forward.1} parent=31 // pred_fallthru
        _
    $region32: #{domain_classifier_forward.1} parent=5 // pred_fallthru
      _
    %p188 = scmp.le.s32.totalorder 1, %s11
    %p189 = scmp.lt.s32.totalorder %s11, 3
    %p190 = pnand %p188, %p189
    %p191 = pneg %p190
    // Predicated region
    $region37: #{domain_classifier_forward.1} parent=5 // pred_check
      _
    $region38: #{domain_classifier_forward.1} parent=5 // pred_check_branch
      %193 = sbr.rel (%p190) target = $region40
    $region39: #{domain_classifier_forward.1} parent=5 // pred_region
      %s194 = ssub.s32 %s11, 1
      %s195 = smul.u32 16, %s16
      %p196 = scmp.lt.s32.totalorder %s195, 31
      %s197 = scalar_select %p196, %s195, 31
      %s198 = smul.addr %s197, 2
      %s199 = smul.addr %s198, 4
      %s200 = scalar_lea.vmem %s0, %s199
      %p201 = pneg %p37
      %p202 = pneg %p34
      %p203 = pneg %p58
      %p204 = pneg %p55
      %p205 = pneg %p79
      %p206 = pneg %p76
      %p207 = pneg %p100
      %p208 = pneg %p97
      %p209 = pneg %p121
      %p210 = pneg %p118
      %p211 = pneg %p147
      %p212 = pneg %p144
      %s213 = smul.u32 16, %s16
      %p214 = scmp.lt.s32.totalorder %s213, 31
      %s215 = scalar_select %p214, %s213, 31
      %s216 = smul.addr %s215, 8
      %s217 = scalar_lea.vmem %s5, %s216
      %s218 = smul.u32 16, %s16
      %p219 = scmp.lt.s32.totalorder %s218, 31
      %s220 = scalar_select %p219, %s218, 31
      %s221 = smul.addr %s220, 2
      %s222 = smul.addr %s221, 4
      %s223 = scalar_lea.vmem %s0, %s222
      %s224 = smul.u32 16, %s16
      %s225 = smul.u32 16, %s16
      %p226 = scmp.lt.s32.totalorder %s225, 31
      %s227 = scalar_select %p226, %s225, 31
      %s228 = smul.addr %s227, 8
      %s229 = scalar_lea.vmem %s5, %s228
      %s230 = smul.u32 16, %s16
      %v232 = vld [vmem:[%s223] sm:$0xff]
      %v233 = vld [vmem:[%s223 + $0x8] sm:$0xff]
      %v234 = vld [vmem:[%s223 + $0x10] sm:$0xff]
      %v235 = vld [vmem:[%s223 + $0x18] sm:$0xff]
      %v236 = vld [vmem:[%s223 + $0x20] sm:$0xff]
      %v237 = vld [vmem:[%s223 + $0x28] sm:$0xff]
      %v238 = vld [vmem:[%s223 + $0x30] sm:$0xff]
      %v239 = vld [vmem:[%s223 + $0x38] sm:$0xff]
      %v240 = vld [vmem:[%s223 + $0x40] sm:$0xff]
      %v241 = vld [vmem:[%s223 + $0x48] sm:$0xff]
      %v242 = vld [vmem:[%s223 + $0x50] sm:$0xff]
      %v243 = vld [vmem:[%s223 + $0x58] sm:$0xff]
      %v244 = vld [vmem:[%s223 + $0x60] sm:$0xff]
      %v245 = vld [vmem:[%s223 + $0x68] sm:$0xff]
      %v246 = vld [vmem:[%s223 + $0x70] sm:$0xff]
      %v247 = vld [vmem:[%s223 + $0x78] sm:$0xff]
      %v248 = vld [vmem:[%s1] sm:$0xf]
      %v249 = vld [vmem:[%s1 + $0x4] sm:$0xf]
      %v250 = vld [vmem:[%s1 + $0x8] sm:$0xf]
      %v251 = vld [vmem:[%s1 + $0xc] sm:$0xf]
      %v252 = vld [vmem:[%s1 + $0x10] sm:$0xf]
      %v253 = vld [vmem:[%s1 + $0x14] sm:$0xf]
      %v254 = vld [vmem:[%s1 + $0x18] sm:$0xf]
      %v255 = vld [vmem:[%s1 + $0x1c] sm:$0xf]
      %v256 = vld [vmem:[%s1 + $0x20] sm:$0xf]
      %v257 = vld [vmem:[%s1 + $0x24] sm:$0xf]
      %v258 = vld [vmem:[%s1 + $0x28] sm:$0xf]
      %v259 = vld [vmem:[%s1 + $0x2c] sm:$0xf]
      %v260 = vld [vmem:[%s1 + $0x30] sm:$0xf]
      %v261 = vld [vmem:[%s1 + $0x34] sm:$0xf]
      %v262 = vld [vmem:[%s1 + $0x38] sm:$0xf]
      %v263 = vld [vmem:[%s1 + $0x3c] sm:$0xf]
      %v264 = vld [vmem:[%s1 + $0x40] sm:$0xf]
      %v265 = vld [vmem:[%s1 + $0x44] sm:$0xf]
      %v266 = vld [vmem:[%s1 + $0x48] sm:$0xf]
      %v267 = vld [vmem:[%s1 + $0x4c] sm:$0xf]
      %v268 = vld [vmem:[%s1 + $0x50] sm:$0xf]
      %v269 = vld [vmem:[%s1 + $0x54] sm:$0xf]
      %v270 = vld [vmem:[%s1 + $0x58] sm:$0xf]
      %v271 = vld [vmem:[%s1 + $0x5c] sm:$0xf]
      %v272 = vld [vmem:[%s1 + $0x60] sm:$0xf]
      %v273 = vld [vmem:[%s1 + $0x64] sm:$0xf]
      %v274 = vld [vmem:[%s1 + $0x68] sm:$0xf]
      %v275 = vld [vmem:[%s1 + $0x6c] sm:$0xf]
      %v276 = vld [vmem:[%s1 + $0x70] sm:$0xf]
      %v277 = vld [vmem:[%s1 + $0x74] sm:$0xf]
      %v278 = vld [vmem:[%s1 + $0x78] sm:$0xf]
      %v279 = vld [vmem:[%s1 + $0x7c] sm:$0xf]
      %v280 = vld [vmem:[%s2] sm:$0x1]
      %v282 = vlaneseq
      %v283 = vshrl.u32 %v282, 7
      %v284 = vsub.s32 0, %v283
      %v285 = vrot.slane %v280, %v284
      %v303 = vunpack.c.l.b16 %v232
      %v304 = vunpack.c.h.b16 %v232
      %v305 = vunpack.c.l.b16 %v233
      %v306 = vunpack.c.h.b16 %v233
      %v307 = vunpack.c.l.b16 %v234
      %v308 = vunpack.c.h.b16 %v234
      %v309 = vunpack.c.l.b16 %v235
      %v310 = vunpack.c.h.b16 %v235
      %v311 = vunpack.c.l.b16 %v236
      %v312 = vunpack.c.h.b16 %v236
      %v313 = vunpack.c.l.b16 %v237
      %v314 = vunpack.c.h.b16 %v237
      %v315 = vunpack.c.l.b16 %v238
      %v316 = vunpack.c.h.b16 %v238
      %v317 = vunpack.c.l.b16 %v239
      %v318 = vunpack.c.h.b16 %v239
      %v319 = vunpack.c.l.b16 %v240
      %v320 = vunpack.c.h.b16 %v240
      %v321 = vunpack.c.l.b16 %v241
      %v322 = vunpack.c.h.b16 %v241
      %v323 = vunpack.c.l.b16 %v242
      %v324 = vunpack.c.h.b16 %v242
      %v325 = vunpack.c.l.b16 %v243
      %v326 = vunpack.c.h.b16 %v243
      %v327 = vunpack.c.l.b16 %v244
      %v328 = vunpack.c.h.b16 %v244
      %v329 = vunpack.c.l.b16 %v245
      %v330 = vunpack.c.h.b16 %v245
      %v331 = vunpack.c.l.b16 %v246
      %v332 = vunpack.c.h.b16 %v246
      %v333 = vunpack.c.l.b16 %v247
      %v334 = vunpack.c.h.b16 %v247
      %v335 = vpack.c.b16 %v305, %v303
      %v336 = vpack.c.b16 %v306, %v304
      %v337 = vpack.c.b16 %v309, %v307
      %v338 = vpack.c.b16 %v310, %v308
      %v339 = vpack.c.b16 %v313, %v311
      %v340 = vpack.c.b16 %v314, %v312
      %v341 = vpack.c.b16 %v317, %v315
      %v342 = vpack.c.b16 %v318, %v316
      %v343 = vpack.c.b16 %v321, %v319
      %v344 = vpack.c.b16 %v322, %v320
      %v345 = vpack.c.b16 %v325, %v323
      %v346 = vpack.c.b16 %v326, %v324
      %v347 = vpack.c.b16 %v329, %v327
      %v348 = vpack.c.b16 %v330, %v328
      %v349 = vpack.c.b16 %v333, %v331
      %v350 = vpack.c.b16 %v334, %v332
      %v399 = vunpack.c.l.b16 %v248
      %v400 = vunpack.c.l.b16 %v249
      %v401 = vunpack.c.l.b16 %v250
      %v402 = vunpack.c.l.b16 %v251
      %v403 = vunpack.c.l.b16 %v252
      %v404 = vunpack.c.l.b16 %v253
      %v405 = vunpack.c.l.b16 %v254
      %v406 = vunpack.c.l.b16 %v255
      %v407 = vunpack.c.l.b16 %v256
      %v408 = vunpack.c.l.b16 %v257
      %v409 = vunpack.c.l.b16 %v258
      %v410 = vunpack.c.l.b16 %v259
      %v411 = vunpack.c.l.b16 %v260
      %v412 = vunpack.c.l.b16 %v261
      %v413 = vunpack.c.l.b16 %v262
      %v414 = vunpack.c.l.b16 %v263
      %v415 = vunpack.c.l.b16 %v264
      %v416 = vunpack.c.l.b16 %v265
      %v417 = vunpack.c.l.b16 %v266
      %v418 = vunpack.c.l.b16 %v267
      %v419 = vunpack.c.l.b16 %v268
      %v420 = vunpack.c.l.b16 %v269
      %v421 = vunpack.c.l.b16 %v270
      %v422 = vunpack.c.l.b16 %v271
      %v423 = vunpack.c.l.b16 %v272
      %v424 = vunpack.c.l.b16 %v273
      %v425 = vunpack.c.l.b16 %v274
      %v426 = vunpack.c.l.b16 %v275
      %v427 = vunpack.c.l.b16 %v276
      %v428 = vunpack.c.l.b16 %v277
      %v429 = vunpack.c.l.b16 %v278
      %v430 = vunpack.c.l.b16 %v279
      %v431 = vpack.c.b16 %v400, %v399
      %v432 = vpack.c.b16 %v402, %v401
      %v433 = vpack.c.b16 %v404, %v403
      %v434 = vpack.c.b16 %v406, %v405
      %v435 = vpack.c.b16 %v408, %v407
      %v436 = vpack.c.b16 %v410, %v409
      %v437 = vpack.c.b16 %v412, %v411
      %v438 = vpack.c.b16 %v414, %v413
      %v439 = vpack.c.b16 %v416, %v415
      %v440 = vpack.c.b16 %v418, %v417
      %v441 = vpack.c.b16 %v420, %v419
      %v442 = vpack.c.b16 %v422, %v421
      %v443 = vpack.c.b16 %v424, %v423
      %v444 = vpack.c.b16 %v426, %v425
      %v445 = vpack.c.b16 %v428, %v427
      %v446 = vpack.c.b16 %v430, %v429
      %463 = vmatprep.subr.bf16.mxu0 0
      %464 = vmatpush1.bf16.msra.mxu0 %v431
      %465 = vmatprep.subr.bf16.mxu0 0
      %466 = vmatpush1.bf16.msra.mxu0 %v432
      %467 = vmatprep.subr.bf16.mxu0 0
      %468 = vmatpush1.bf16.msra.mxu0 %v433
      %469 = vmatprep.subr.bf16.mxu0 0
      %470 = vmatpush1.bf16.msra.mxu0 %v434
      %471 = vmatprep.subr.bf16.mxu0 0
      %472 = vmatpush1.bf16.msra.mxu0 %v435
      %473 = vmatprep.subr.bf16.mxu0 0
      %474 = vmatpush1.bf16.msra.mxu0 %v436
      %475 = vmatprep.subr.bf16.mxu0 0
      %476 = vmatpush1.bf16.msra.mxu0 %v437
      %477 = vmatprep.subr.bf16.mxu0 0
      %478 = vmatpush1.bf16.msra.mxu0 %v438
      %479 = vmatprep.subr.bf16.mxu0 0
      %480 = vmatpush1.bf16.msra.mxu0 %v439
      %481 = vmatprep.subr.bf16.mxu0 0
      %482 = vmatpush1.bf16.msra.mxu0 %v440
      %483 = vmatprep.subr.bf16.mxu0 0
      %484 = vmatpush1.bf16.msra.mxu0 %v441
      %485 = vmatprep.subr.bf16.mxu0 0
      %486 = vmatpush1.bf16.msra.mxu0 %v442
      %487 = vmatprep.subr.bf16.mxu0 0
      %488 = vmatpush1.bf16.msra.mxu0 %v443
      %489 = vmatprep.subr.bf16.mxu0 0
      %490 = vmatpush1.bf16.msra.mxu0 %v444
      %491 = vmatprep.subr.bf16.mxu0 0
      %492 = vmatpush1.bf16.msra.mxu0 %v445
      %493 = vmatprep.subr.bf16.mxu0 0
      %494 = vmatpush1.bf16.msra.mxu0 %v446
      %495 = vmatprep.mubr.bf16.mxu0 %v336
      %496 = vmatmul.mubr.bf16.gmra.mrb[0].mxu0 %v335
      %v497 = vpop.f32.mrb[0].mxu0
      %v498 = vadd.f32 %v285, %v497
      %v499 = vpop.f32.mrb[0].mxu0
      %v500 = vpop.f32.mrb[0].mxu0
      %v501 = vadd.f32 %v285, %v500
      %v502 = vpop.f32.mrb[0].mxu0
      %503 = vmatprep.mubr.bf16.mxu0 %v338
      %504 = vmatmul.mubr.bf16.gmra.mrb[0].mxu0 %v337
      %v505 = vpop.f32.mrb[0].mxu0
      %v506 = vadd.f32 %v285, %v505
      %v507 = vpop.f32.mrb[0].mxu0
      %v508 = vpop.f32.mrb[0].mxu0
      %v509 = vadd.f32 %v285, %v508
      %v510 = vpop.f32.mrb[0].mxu0
      %511 = vmatprep.mubr.bf16.mxu0 %v340
      %512 = vmatmul.mubr.bf16.gmra.mrb[0].mxu0 %v339
      %v513 = vpop.f32.mrb[0].mxu0
      %v514 = vadd.f32 %v285, %v513
      %v515 = vpop.f32.mrb[0].mxu0
      %v516 = vpop.f32.mrb[0].mxu0
      %v517 = vadd.f32 %v285, %v516
      %v518 = vpop.f32.mrb[0].mxu0
      %519 = vmatprep.mubr.bf16.mxu0 %v342
      %520 = vmatmul.mubr.bf16.gmra.mrb[0].mxu0 %v341
      %v521 = vpop.f32.mrb[0].mxu0
      %v522 = vadd.f32 %v285, %v521
      %v523 = vpop.f32.mrb[0].mxu0
      %v524 = vpop.f32.mrb[0].mxu0
      %v525 = vadd.f32 %v285, %v524
      %v526 = vpop.f32.mrb[0].mxu0
      %527 = vmatprep.mubr.bf16.mxu0 %v344
      %528 = vmatmul.mubr.bf16.gmra.mrb[0].mxu0 %v343
      %v529 = vpop.f32.mrb[0].mxu0
      %v530 = vadd.f32 %v285, %v529
      %v531 = vpop.f32.mrb[0].mxu0
      %v532 = vpop.f32.mrb[0].mxu0
      %v533 = vadd.f32 %v285, %v532
      %v534 = vpop.f32.mrb[0].mxu0
      %535 = vmatprep.mubr.bf16.mxu0 %v346
      %536 = vmatmul.mubr.bf16.gmra.mrb[0].mxu0 %v345
      %v537 = vpop.f32.mrb[0].mxu0
      %v538 = vadd.f32 %v285, %v537
      %v539 = vpop.f32.mrb[0].mxu0
      %v540 = vpop.f32.mrb[0].mxu0
      %v541 = vadd.f32 %v285, %v540
      %v542 = vpop.f32.mrb[0].mxu0
      %543 = vmatprep.mubr.bf16.mxu0 %v348
      %544 = vmatmul.mubr.bf16.gmra.mrb[0].mxu0 %v347
      %v545 = vpop.f32.mrb[0].mxu0
      %v546 = vadd.f32 %v285, %v545
      %v547 = vpop.f32.mrb[0].mxu0
      %v548 = vpop.f32.mrb[0].mxu0
      %v549 = vadd.f32 %v285, %v548
      %v550 = vpop.f32.mrb[0].mxu0
      %551 = vmatprep.mubr.bf16.mxu0 %v350
      %552 = vmatmul.mubr.bf16.gmra.mrb[0].mxu0 %v349
      %v553 = vpop.f32.mrb[0].mxu0
      %v554 = vadd.f32 %v285, %v553
      %v555 = vpop.f32.mrb[0].mxu0
      %v556 = vpop.f32.mrb[0].mxu0
      %v557 = vadd.f32 %v285, %v556
      %v558 = vpop.f32.mrb[0].mxu0
      %559 = vdwg.mxu0
      %v560 = vmax.f32 %v498, 0.0
      %v561 = vmax.f32 %v501, 0.0
      %v562 = vmax.f32 %v506, 0.0
      %v563 = vmax.f32 %v509, 0.0
      %v564 = vmax.f32 %v514, 0.0
      %v565 = vmax.f32 %v517, 0.0
      %v566 = vmax.f32 %v522, 0.0
      %v567 = vmax.f32 %v525, 0.0
      %v568 = vmax.f32 %v530, 0.0
      %v569 = vmax.f32 %v533, 0.0
      %v570 = vmax.f32 %v538, 0.0
      %v571 = vmax.f32 %v541, 0.0
      %v572 = vmax.f32 %v546, 0.0
      %v573 = vmax.f32 %v549, 0.0
      %v574 = vmax.f32 %v554, 0.0
      %v575 = vmax.f32 %v557, 0.0
      %v576 = vpack.c.bf16 %v561, %v560
      %v577 = vpack.c.bf16 %v563, %v562
      %v578 = vpack.c.bf16 %v565, %v564
      %v579 = vpack.c.bf16 %v567, %v566
      %v580 = vpack.c.bf16 %v569, %v568
      %v581 = vpack.c.bf16 %v571, %v570
      %v582 = vpack.c.bf16 %v573, %v572
      %v583 = vpack.c.bf16 %v575, %v574
      %v584 = vld [vmem:[%s3] sm:$0xf]
      %v585 = vld [vmem:[%s3 + $0x4] sm:$0xf]
      %v586 = vld [vmem:[%s3 + $0x8] sm:$0xf]
      %v587 = vld [vmem:[%s3 + $0xc] sm:$0xf]
      %v588 = vld [vmem:[%s3 + $0x10] sm:$0xf]
      %v589 = vld [vmem:[%s3 + $0x14] sm:$0xf]
      %v590 = vld [vmem:[%s3 + $0x18] sm:$0xf]
      %v591 = vld [vmem:[%s3 + $0x1c] sm:$0xf]
      %v592 = vld [vmem:[%s3 + $0x20] sm:$0xf]
      %v593 = vld [vmem:[%s3 + $0x24] sm:$0xf]
      %v594 = vld [vmem:[%s3 + $0x28] sm:$0xf]
      %v595 = vld [vmem:[%s3 + $0x2c] sm:$0xf]
      %v596 = vld [vmem:[%s3 + $0x30] sm:$0xf]
      %v597 = vld [vmem:[%s3 + $0x34] sm:$0xf]
      %v598 = vld [vmem:[%s3 + $0x38] sm:$0xf]
      %v599 = vld [vmem:[%s3 + $0x3c] sm:$0xf]
      %v600 = vld [vmem:[%s4] sm:$0x1]
      %v602 = vlaneseq
      %v603 = vshrl.u32 %v602, 7
      %v604 = vsub.s32 0, %v603
      %v605 = vrot.slane %v600, %v604
      %v623 = vunpack.c.l.b16 %v584
      %v624 = vunpack.c.l.b16 %v585
      %v625 = vunpack.c.l.b16 %v586
      %v626 = vunpack.c.l.b16 %v587
      %v627 = vunpack.c.l.b16 %v588
      %v628 = vunpack.c.l.b16 %v589
      %v629 = vunpack.c.l.b16 %v590
      %v630 = vunpack.c.l.b16 %v591
      %v631 = vunpack.c.l.b16 %v592
      %v632 = vunpack.c.l.b16 %v593
      %v633 = vunpack.c.l.b16 %v594
      %v634 = vunpack.c.l.b16 %v595
      %v635 = vunpack.c.l.b16 %v596
      %v636 = vunpack.c.l.b16 %v597
      %v637 = vunpack.c.l.b16 %v598
      %v638 = vunpack.c.l.b16 %v599
      %v639 = vpack.c.b16 %v624, %v623
      %v640 = vpack.c.b16 %v626, %v625
      %v641 = vpack.c.b16 %v628, %v627
      %v642 = vpack.c.b16 %v630, %v629
      %v643 = vpack.c.b16 %v632, %v631
      %v644 = vpack.c.b16 %v634, %v633
      %v645 = vpack.c.b16 %v636, %v635
      %v646 = vpack.c.b16 %v638, %v637
      %655 = vmatprep.subr.bf16.mxu0 0
      %656 = vmatpush1.bf16.msra.mxu0 %v639
      %657 = vmatprep.subr.bf16.mxu0 0
      %658 = vmatpush1.bf16.msra.mxu0 %v640
      %659 = vmatprep.subr.bf16.mxu0 0
      %660 = vmatpush1.bf16.msra.mxu0 %v641
      %661 = vmatprep.subr.bf16.mxu0 0
      %662 = vmatpush1.bf16.msra.mxu0 %v642
      %663 = vmatprep.subr.bf16.mxu0 0
      %664 = vmatpush1.bf16.msra.mxu0 %v643
      %665 = vmatprep.subr.bf16.mxu0 0
      %666 = vmatpush1.bf16.msra.mxu0 %v644
      %667 = vmatprep.subr.bf16.mxu0 0
      %668 = vmatpush1.bf16.msra.mxu0 %v645
      %669 = vmatprep.subr.bf16.mxu0 0
      %670 = vmatpush1.bf16.msra.mxu0 %v646
      %671 = vmatprep.subr.bf16.mxu0 0
      %672 = vmatpush1.bf16.msra.mxu0 0
      %673 = vmatprep.subr.bf16.mxu0 0
      %674 = vmatpush1.bf16.msra.mxu0 0
      %675 = vmatprep.subr.bf16.mxu0 0
      %676 = vmatpush1.bf16.msra.mxu0 0
      %677 = vmatprep.subr.bf16.mxu0 0
      %678 = vmatpush1.bf16.msra.mxu0 0
      %679 = vmatprep.subr.bf16.mxu0 0
      %680 = vmatpush1.bf16.msra.mxu0 0
      %681 = vmatprep.subr.bf16.mxu0 0
      %682 = vmatpush1.bf16.msra.mxu0 0
      %683 = vmatprep.subr.bf16.mxu0 0
      %684 = vmatpush1.bf16.msra.mxu0 0
      %685 = vmatprep.subr.bf16.mxu0 0
      %686 = vmatpush1.bf16.msra.mxu0 0
      %687 = vmatprep.mubr.bf16.mxu0 0
      %688 = vmatmul.mubr.bf16.gmra.mrb[0].mxu0 %v576
      %v689 = vpop.f32.mrb[0].mxu0
      %v690 = vadd.f32 %v605, %v689
      %v691 = vpop.f32.mrb[0].mxu0
      %v692 = vpop.f32.mrb[0].mxu0
      %v693 = vadd.f32 %v605, %v692
      %v694 = vpop.f32.mrb[0].mxu0
      %695 = vmatprep.mubr.bf16.mxu0 0
      %696 = vmatmul.mubr.bf16.gmra.mrb[0].mxu0 %v577
      %v697 = vpop.f32.mrb[0].mxu0
      %v698 = vadd.f32 %v605, %v697
      %v699 = vpop.f32.mrb[0].mxu0
      %v700 = vpop.f32.mrb[0].mxu0
      %v701 = vadd.f32 %v605, %v700
      %v702 = vpop.f32.mrb[0].mxu0
      %703 = vmatprep.mubr.bf16.mxu0 0
      %704 = vmatmul.mubr.bf16.gmra.mrb[0].mxu0 %v578
      %v705 = vpop.f32.mrb[0].mxu0
      %v706 = vadd.f32 %v605, %v705
      %v707 = vpop.f32.mrb[0].mxu0
      %v708 = vpop.f32.mrb[0].mxu0
      %v709 = vadd.f32 %v605, %v708
      %v710 = vpop.f32.mrb[0].mxu0
      %711 = vmatprep.mubr.bf16.mxu0 0
      %712 = vmatmul.mubr.bf16.gmra.mrb[0].mxu0 %v579
      %v713 = vpop.f32.mrb[0].mxu0
      %v714 = vadd.f32 %v605, %v713
      %v715 = vpop.f32.mrb[0].mxu0
      %v716 = vpop.f32.mrb[0].mxu0
      %v717 = vadd.f32 %v605, %v716
      %v718 = vpop.f32.mrb[0].mxu0
      %719 = vmatprep.mubr.bf16.mxu0 0
      %720 = vmatmul.mubr.bf16.gmra.mrb[0].mxu0 %v580
      %v721 = vpop.f32.mrb[0].mxu0
      %v722 = vadd.f32 %v605, %v721
      %v723 = vpop.f32.mrb[0].mxu0
      %v724 = vpop.f32.mrb[0].mxu0
      %v725 = vadd.f32 %v605, %v724
      %v726 = vpop.f32.mrb[0].mxu0
      %727 = vmatprep.mubr.bf16.mxu0 0
      %728 = vmatmul.mubr.bf16.gmra.mrb[0].mxu0 %v581
      %v729 = vpop.f32.mrb[0].mxu0
      %v730 = vadd.f32 %v605, %v729
      %v731 = vpop.f32.mrb[0].mxu0
      %v732 = vpop.f32.mrb[0].mxu0
      %v733 = vadd.f32 %v605, %v732
      %v734 = vpop.f32.mrb[0].mxu0
      %735 = vmatprep.mubr.bf16.mxu0 0
      %736 = vmatmul.mubr.bf16.gmra.mrb[0].mxu0 %v582
      %v737 = vpop.f32.mrb[0].mxu0
      %v738 = vadd.f32 %v605, %v737
      %v739 = vpop.f32.mrb[0].mxu0
      %v740 = vpop.f32.mrb[0].mxu0
      %v741 = vadd.f32 %v605, %v740
      %v742 = vpop.f32.mrb[0].mxu0
      %743 = vmatprep.mubr.bf16.mxu0 0
      %744 = vmatmul.mubr.bf16.gmra.mrb[0].mxu0 %v583
      %v745 = vpop.f32.mrb[0].mxu0
      %v746 = vadd.f32 %v605, %v745
      %v747 = vpop.f32.mrb[0].mxu0
      %v748 = vpop.f32.mrb[0].mxu0
      %v749 = vadd.f32 %v605, %v748
      %v750 = vpop.f32.mrb[0].mxu0
      %751 = vdwg.mxu0
      %752 = vst [vmem:[%s229] sm:$0xff] %v690
      %753 = vst [vmem:[%s229 + $0x8] sm:$0xff] %v693
      %754 = vst [vmem:[%s229 + $0x10] sm:$0xff] %v698
      %755 = vst [vmem:[%s229 + $0x18] sm:$0xff] %v701
      %756 = vst [vmem:[%s229 + $0x20] sm:$0xff] %v706
      %757 = vst [vmem:[%s229 + $0x28] sm:$0xff] %v709
      %758 = vst [vmem:[%s229 + $0x30] sm:$0xff] %v714
      %759 = vst [vmem:[%s229 + $0x38] sm:$0xff] %v717
      %760 = vst [vmem:[%s229 + $0x40] sm:$0xff] %v722
      %761 = vst [vmem:[%s229 + $0x48] sm:$0xff] %v725
      %762 = vst [vmem:[%s229 + $0x50] sm:$0xff] %v730
      %763 = vst [vmem:[%s229 + $0x58] sm:$0xff] %v733
      %764 = vst [vmem:[%s229 + $0x60] sm:$0xff] %v738
      %765 = vst [vmem:[%s229 + $0x68] sm:$0xff] %v741
      %766 = vst [vmem:[%s229 + $0x70] sm:$0xff] %v746
      %767 = vst [vmem:[%s229 + $0x78] sm:$0xff] %v749
      %s768 = smul.u32 16, %s16
      %p769 = scmp.lt.s32.totalorder %s768, 31
      %s770 = scalar_select %p769, %s768, 31
      %s771 = smul.addr %s770, 8
      %s772 = scalar_lea.vmem %s5, %s771
      // Predicated region
      $region41: #{domain_classifier_forward.1} parent=39 // pred_check
        %p773 = pneg %p144
      $region42: #{domain_classifier_forward.1} parent=39 // pred_check_branch
        %775 = sbr.rel (%p773) target = $region44
      $region43: #{domain_classifier_forward.1} parent=39 // pred_region
        %s776 = smul.u32 16, %s16
      $region44: #{domain_classifier_forward.1} parent=39 // pred_fallthru
        _
    $region40: #{domain_classifier_forward.1} parent=5 // pred_fallthru
      _
    %p777 = scmp.le.s32.totalorder 2, %s11
    // Predicated region
    $region45: #{domain_classifier_forward.1} parent=5 // pred_check
      %p778 = pneg %p777
    $region46: #{domain_classifier_forward.1} parent=5 // pred_check_branch
      %780 = sbr.rel (%p778) target = $region48
    $region47: #{domain_classifier_forward.1} parent=5 // pred_region
      %s781 = ssub.s32 %s11, 2
      // Predicated region
      $region49: #{domain_classifier_forward.1} parent=47 // pred_check
        %p782 = pneg %p150
      $region50: #{domain_classifier_forward.1} parent=47 // pred_check_branch
        %784 = sbr.rel (%p782) target = $region52
      $region51: #{domain_classifier_forward.1} parent=47 // pred_region
        %s785 = smul.u32 16, %s17
        %p786 = scmp.lt.s32.totalorder %s785, 31
        %s787 = scalar_select %p786, %s785, 31
        %s788 = smul.addr %s787, 8
        %s789 = scalar_lea.vmem %s5, %s788
      $region52: #{domain_classifier_forward.1} parent=47 // pred_fallthru
        _
    $region48: #{domain_classifier_forward.1} parent=5 // pred_fallthru
      _
  $region6: #{domain_classifier_forward.1} parent=0 // loop_footer
    %s15 = sadd.s32 1, %s11
  $region7: #{domain_classifier_forward.1} parent=0 // loop_footer_branch
    %10 = sbr.rel target = $region3
  $region8: #{domain_classifier_forward.1} parent=0 // loop_exit
    _

</llo_original>
